<compile_context>
chip_gen: v7x
topology: tpu7x:2x2x1
jax: 0.10.0
libtpu: 0.0.40
codegen_flags: <defaults>
</compile_context>

<pallas_src>
import jax
import jax.numpy as jnp
from jax.experimental import pallas as pl
from jax.experimental.pallas import tpu as pltpu

_LANE = 128
_SUBLANE = 16          # keep row tiles bf16-packing friendly


def _round_up(x, m):
    return ((x + m - 1) // m) * m


def _mlp_kernel(x_ref, w1_ref, b1_ref, w2_ref, b2_ref, w3_ref, b3_ref, out_ref):
    # x_ref : (TM, D)  f32   row tile of the batch (D = 2*obs_dim + act_dim, unpadded)
    # w1    : (D, Hp)  f32,  b1/b2: (1, Hp) f32
    # w2    : (Hp, Hp) bf16
    # w3    : (1, Hp)  f32   (Linear(H,1) weight stored as a row)
    # b3    : (1, 1)   f32
    # out   : (TM, 1)  f32
    x = x_ref[...]

    # Layer 1: f32 MXU matmul with tiny K, f32 bias + ReLU on the VPU.
    h1 = jnp.dot(x, w1_ref[...], preferred_element_type=jnp.float32)
    h1 = jnp.maximum(h1 + b1_ref[...], 0.0)

    # Layer 2: bf16 MXU matmul, f32 accumulation.
    h2 = jnp.dot(h1.astype(w2_ref.dtype), w2_ref[...],
                 preferred_element_type=jnp.float32)
    h2 = jnp.maximum(h2 + b2_ref[...], 0.0)

    # Layer 3, Linear(H, 1): VPU multiply + XLU lane reduction.  Avoids an
    # N=1 MXU matmul and a 128-lane-wide output slab entirely.
    y = jnp.sum(h2 * w3_ref[...], axis=1, keepdims=True) + b3_ref[...]
    out_ref[...] = y


def prepare_params(params):
    """One-time padding/casting of the weights to MXU/lane-friendly shapes.

    Call once and reuse the result across forward calls (hoisted out of the
    per-call path on purpose).
    """
    D, H = params["w1"].shape
    Hp = _round_up(H, _LANE)

    def pad2(a, rows, cols):
        return jnp.pad(a, ((0, rows - a.shape[0]), (0, cols - a.shape[1])))

    return {
        "w1": pad2(params["w1"], D, Hp).astype(jnp.float32),              # (D, Hp)
        "b1": pad2(params["b1"].reshape(1, -1), 1, Hp).astype(jnp.float32),
        "w2": pad2(params["w2"], Hp, Hp).astype(jnp.bfloat16),            # (Hp, Hp)
        "b2": pad2(params["b2"].reshape(1, -1), 1, Hp).astype(jnp.float32),
        "w3": pad2(params["w3"].reshape(1, -1), 1, Hp).astype(jnp.float32),  # row vec
        "b3": params["b3"].reshape(1, 1).astype(jnp.float32),
    }


def mlp_reward_predictor_forward(x, prepared, *, tile_m=None):
    """x: (B, 2*obs_dim+act_dim) f32 -> (B, 1) f32 logits (matches the nn.Sequential)."""
    B, D = x.shape
    Dw, Hp = prepared["w1"].shape
    assert D == Dw, (D, Dw)

    if tile_m is None:
        # Large tiles amortize the ~0.35 us/grid-step overhead; keep at least
        # 2 grid steps so the "parallel" axis can use both v7x TensorCores.
        tile_m = min(2048, _round_up(pl.cdiv(B, 2), _SUBLANE))
    tile_m = max(_SUBLANE, _round_up(tile_m, _SUBLANE))
    grid = (pl.cdiv(B, tile_m),)

    def whole(rows, cols):          # resident weights / biases: same block each step
        return pl.BlockSpec((rows, cols), lambda i: (0, 0))

    out = pl.pallas_call(
        _mlp_kernel,
        out_shape=jax.ShapeDtypeStruct((B, 1), jnp.float32),
        grid=grid,
        in_specs=[
            pl.BlockSpec((tile_m, D), lambda i: (i, 0)),   # x row tile, unpadded
            whole(D, Hp),  whole(1, Hp),                   # w1, b1
            whole(Hp, Hp), whole(1, Hp),                   # w2, b2
            whole(1, Hp),  whole(1, 1),                    # w3 (row), b3
        ],
        out_specs=pl.BlockSpec((tile_m, 1), lambda i: (i, 0)),
        compiler_params=pltpu.CompilerParams(
            # independent batch tiles -> shard across both TCs on v7x
            dimension_semantics=("parallel",),
        ),
    )(x, prepared["w1"], prepared["b1"], prepared["w2"], prepared["b2"],
      prepared["w3"], prepared["b3"])
    return out


def init_params(key, in_dim, hidden_dim):
    """Deterministic synthetic init (shapes match the nn.Linear layers)."""
    k1, k2, k3, k4, k5, k6 = jax.random.split(key, 6)

    def u(k, shape, fan_in):
        bound = 1.0 / jnp.sqrt(fan_in)
        return jax.random.uniform(k, shape, jnp.float32, -bound, bound)

    return {
        # stored as (in, out); PyTorch stores (out, in) and transposes in F.linear
        "w1": u(k1, (in_dim, hidden_dim), in_dim),
        "b1": u(k2, (hidden_dim,), in_dim),
        "w2": u(k3, (hidden_dim, hidden_dim), hidden_dim),
        "b2": u(k4, (hidden_dim,), hidden_dim),
        "w3": u(k5, (hidden_dim, 1), hidden_dim),
        "b3": u(k6, (1,), hidden_dim),
    }


def _reference_forward(x, params):
    h1 = jnp.maximum(x @ params["w1"] + params["b1"], 0.0)
    h2 = jnp.maximum(h1 @ params["w2"] + params["b2"], 0.0)
    return h2 @ params["w3"] + params["b3"]


if __name__ == "__main__":
    # Shapes consistent with the module: Linear(2*obs_dim + act_dim, hidden_dim)
    obs_dim, act_dim, hidden_dim = 5, 3, 32
    in_dim = 2 * obs_dim + act_dim          # 13
    batch = 64                              # module default batch_size

    key = jax.random.PRNGKey(0)
    kx, kp = jax.random.split(key)
    x = jax.random.normal(kx, (batch, in_dim), dtype=jnp.float32)
    params = init_params(kp, in_dim, hidden_dim)

    prepared = prepare_params(params)       # one-time weight pad/cast (hoisted)
    fwd = jax.jit(mlp_reward_predictor_forward)

    # Default tiling at B=64 gives tile_m=32 -> grid=(2,), exercising the
    # batch-tiled index maps and the resident-weight specs.
    pred = jax.block_until_ready(fwd(x, prepared))

    ref = _reference_forward(x, params)
    assert pred.shape == (batch, 1), pred.shape
    # Only layer 2 runs in bf16 (f32 accumulation) -> slightly loose tolerance.
    assert jnp.allclose(pred, ref, atol=2e-2, rtol=2e-2), float(
        jnp.max(jnp.abs(pred - ref)))
    print("KERNEL_OK")
</pallas_src>

<mosaic_0001>
module attributes {stable_mosaic.version = 11 : i64} {
  func.func @_mlp_kernel(%arg0: i32, %arg1: memref<32x13xf32, #tpu.memory_space<vmem>>, %arg2: memref<13x128xf32, #tpu.memory_space<vmem>>, %arg3: memref<1x128xf32, #tpu.memory_space<vmem>>, %arg4: memref<128x128xbf16, #tpu.memory_space<vmem>>, %arg5: memref<1x128xf32, #tpu.memory_space<vmem>>, %arg6: memref<1x128xf32, #tpu.memory_space<vmem>>, %arg7: memref<1x1xf32, #tpu.memory_space<vmem>>, %arg8: memref<32x1xf32, #tpu.memory_space<vmem>>) attributes {dimension_semantics = [#tpu.dimension_semantics<parallel>], iteration_bounds = array<i64: 2>, scalar_prefetch = 0 : i64, scratch_operands = 0 : i64, tpu.core_type = #tpu.core_type<tc>, window_params = [{transform_indices = @transform_0, window_bounds = array<i64: 32, 13>}, {pipeline_mode = #tpu.pipeline_mode<synchronous>, transform_indices = @transform_1, window_bounds = array<i64: 13, 128>}, {pipeline_mode = #tpu.pipeline_mode<synchronous>, transform_indices = @transform_2, window_bounds = array<i64: 1, 128>}, {pipeline_mode = #tpu.pipeline_mode<synchronous>, transform_indices = @transform_3, window_bounds = array<i64: 128, 128>}, {pipeline_mode = #tpu.pipeline_mode<synchronous>, transform_indices = @transform_4, window_bounds = array<i64: 1, 128>}, {pipeline_mode = #tpu.pipeline_mode<synchronous>, transform_indices = @transform_5, window_bounds = array<i64: 1, 128>}, {pipeline_mode = #tpu.pipeline_mode<synchronous>, transform_indices = @transform_6, window_bounds = array<i64: 1, 1>}, {transform_indices = @transform_7, window_bounds = array<i64: 32, 1>}]} {
    %c0 = arith.constant 0 : index
    %c0_0 = arith.constant 0 : index
    %0 = vector.load %arg1[%c0, %c0_0] : memref<32x13xf32, #tpu.memory_space<vmem>>, vector<32x13xf32>
    %c0_1 = arith.constant 0 : index
    %c0_2 = arith.constant 0 : index
    %1 = vector.load %arg2[%c0_1, %c0_2] : memref<13x128xf32, #tpu.memory_space<vmem>>, vector<13x128xf32>
    %cst = arith.constant dense<0.000000e+00> : vector<32x128xf32>
    %2 = tpu.matmul %0, %1, %cst {dimension_numbers = #tpu.dot_dimension_numbers<[1], [0], [0], [1], [0, 0, 1, 1], [], []>} : vector<32x13xf32>, vector<13x128xf32>, vector<32x128xf32> -> vector<32x128xf32>
    %c0_3 = arith.constant 0 : index
    %c0_4 = arith.constant 0 : index
    %3 = vector.load %arg3[%c0_3, %c0_4] : memref<1x128xf32, #tpu.memory_space<vmem>>, vector<1x128xf32>
    %4 = vector.broadcast %3 : vector<1x128xf32> to vector<32x128xf32>
    %5 = arith.addf %2, %4 : vector<32x128xf32>
    %cst_5 = arith.constant 0.000000e+00 : f32
    %6 = vector.broadcast %cst_5 : f32 to vector<32x128xf32>
    %7 = arith.maximumf %5, %6 : vector<32x128xf32>
    %8 = arith.truncf %7 : vector<32x128xf32> to vector<32x128xbf16>
    %c0_6 = arith.constant 0 : index
    %c0_7 = arith.constant 0 : index
    %9 = vector.load %arg4[%c0_6, %c0_7] : memref<128x128xbf16, #tpu.memory_space<vmem>>, vector<128x128xbf16>
    %cst_8 = arith.constant dense<0.000000e+00> : vector<32x128xf32>
    %10 = tpu.matmul %8, %9, %cst_8 {dimension_numbers = #tpu.dot_dimension_numbers<[1], [0], [0], [1], [0, 0, 1, 1], [], []>} : vector<32x128xbf16>, vector<128x128xbf16>, vector<32x128xf32> -> vector<32x128xf32>
    %c0_9 = arith.constant 0 : index
    %c0_10 = arith.constant 0 : index
    %11 = vector.load %arg5[%c0_9, %c0_10] : memref<1x128xf32, #tpu.memory_space<vmem>>, vector<1x128xf32>
    %12 = vector.broadcast %11 : vector<1x128xf32> to vector<32x128xf32>
    %13 = arith.addf %10, %12 : vector<32x128xf32>
    %cst_11 = arith.constant 0.000000e+00 : f32
    %14 = vector.broadcast %cst_11 : f32 to vector<32x128xf32>
    %15 = arith.maximumf %13, %14 : vector<32x128xf32>
    %c0_12 = arith.constant 0 : index
    %c0_13 = arith.constant 0 : index
    %16 = vector.load %arg6[%c0_12, %c0_13] : memref<1x128xf32, #tpu.memory_space<vmem>>, vector<1x128xf32>
    %17 = vector.broadcast %16 : vector<1x128xf32> to vector<32x128xf32>
    %18 = arith.mulf %15, %17 : vector<32x128xf32>
    %cst_14 = arith.constant dense<0.000000e+00> : vector<32xf32>
    %19 = vector.multi_reduction <add>, %18, %cst_14 [1] : vector<32x128xf32> to vector<32xf32>
    %20 = vector.shape_cast %19 : vector<32xf32> to vector<32x1xf32>
    %c0_15 = arith.constant 0 : index
    %c0_16 = arith.constant 0 : index
    %21 = vector.load %arg7[%c0_15, %c0_16] : memref<1x1xf32, #tpu.memory_space<vmem>>, vector<1x1xf32>
    %22 = vector.broadcast %21 : vector<1x1xf32> to vector<32x1xf32>
    %23 = arith.addf %20, %22 : vector<32x1xf32>
    %c0_17 = arith.constant 0 : index
    %c0_18 = arith.constant 0 : index
    %24 = vector.load %arg8[%c0_17, %c0_18] : memref<32x1xf32, #tpu.memory_space<vmem>>, vector<32x1xf32>
    tpu.vector_store %arg8[%c0_17, %c0_18], %23 {strides = array<i32>} : memref<32x1xf32, #tpu.memory_space<vmem>>, vector<32x1xf32>,
    return
  }
  func.func @transform_0(%arg0: i32) -> (i32, i32) {
    %c0_i32 = arith.constant 0 : i32
    %c0_i32_0 = arith.constant 0 : i32
    return %arg0, %c0_i32 : i32, i32
  }
  func.func @transform_1(%arg0: i32) -> (i32, i32) {
    %c0_i32 = arith.constant 0 : i32
    %c0_i32_0 = arith.constant 0 : i32
    %c0_i32_1 = arith.constant 0 : i32
    return %c0_i32, %c0_i32_0 : i32, i32
  }
  func.func @transform_2(%arg0: i32) -> (i32, i32) {
    %c0_i32 = arith.constant 0 : i32
    %c0_i32_0 = arith.constant 0 : i32
    %c0_i32_1 = arith.constant 0 : i32
    return %c0_i32, %c0_i32_0 : i32, i32
  }
  func.func @transform_3(%arg0: i32) -> (i32, i32) {
    %c0_i32 = arith.constant 0 : i32
    %c0_i32_0 = arith.constant 0 : i32
    %c0_i32_1 = arith.constant 0 : i32
    return %c0_i32, %c0_i32_0 : i32, i32
  }
  func.func @transform_4(%arg0: i32) -> (i32, i32) {
    %c0_i32 = arith.constant 0 : i32
    %c0_i32_0 = arith.constant 0 : i32
    %c0_i32_1 = arith.constant 0 : i32
    return %c0_i32, %c0_i32_0 : i32, i32
  }
  func.func @transform_5(%arg0: i32) -> (i32, i32) {
    %c0_i32 = arith.constant 0 : i32
    %c0_i32_0 = arith.constant 0 : i32
    %c0_i32_1 = arith.constant 0 : i32
    return %c0_i32, %c0_i32_0 : i32, i32
  }
  func.func @transform_6(%arg0: i32) -> (i32, i32) {
    %c0_i32 = arith.constant 0 : i32
    %c0_i32_0 = arith.constant 0 : i32
    %c0_i32_1 = arith.constant 0 : i32
    return %c0_i32, %c0_i32_0 : i32, i32
  }
  func.func @transform_7(%arg0: i32) -> (i32, i32) {
    %c0_i32 = arith.constant 0 : i32
    %c0_i32_0 = arith.constant 0 : i32
    return %arg0, %c0_i32 : i32, i32
  }
}

</mosaic_0001>

<llo_original>
// kernel: mlp_reward_predictor_forward.1
$region0: #{mlp_reward_predictor_forward.1}
  #allocation0 [shape = 'u32[]', space=smem, size = 0x4, offset = 0x4, fixed_abs, tag = 'smem constant byte address 0x4 - core index']
  #allocation1 [shape = 'u32[144,128]{1,0:T(1,128)}', space=vmem, size = 0x12000, scoped, tag = 'internal scratch']
  #allocation2 [shape = 'f32[1,1]{1,0:T(1,128)S(1)}', space=vmem, size = 0x200, scoped, tag = 'scoped memory for mlp_reward_predictor_forward.1']
  %s0 = inlined_call_operand.vmem [shape: f32[64,13], index: 0, kind: input, shape index: {}]
  %s1 = inlined_call_operand.vmem [shape: f32[13,128], index: 1, kind: input, shape index: {}]
  %s2 = inlined_call_operand.vmem [shape: f32[1,128], index: 2, kind: input, shape index: {}]
  %s3 = inlined_call_operand.vmem [shape: bf16[128,128], index: 3, kind: input, shape index: {}]
  %s4 = inlined_call_operand.vmem [shape: f32[1,128], index: 4, kind: input, shape index: {}]
  %s5 = inlined_call_operand.vmem [shape: f32[1,128], index: 5, kind: input, shape index: {}]
  %s6 = inlined_call_operand.<no memory space> [shape: f32[1,1], index: 6, kind: input, shape index: {}]
  %s7 = inlined_call_operand.vmem [shape: f32[64,1], index: 7, kind: output, shape index: {}]
  %s8 = sld [smem:[#allocation0]]
  $region61: #{mlp_reward_predictor_forward.1} parent=0
    _
  %s10 = ssub.s32 1, %s8
  %s11 = scalar_select 0, %s10, %s8
  %v12 = vstv %s6
  %13 = vst [vmem:[#allocation2] sm:$0x1] %v12
  loop: start=0, step=1, limit=4
  $region2: #{mlp_reward_predictor_forward.1} parent=0 // loop_pre_header
    _
  $region3: #{mlp_reward_predictor_forward.1} parent=0 // loop_header
    %s15 = sphi 0, %s19
    %p16 = scmp.ge.s32.totalorder %s15, 4
    %s25 = sphi 0, %s27
    %s28 = sphi 0, %s25
    %s29 = sphi 0, %s28
    %s45 = sphi 0, %s29
    %s49 = sphi 0, %s49
    %s51 = sphi 0, %s49
    %s52 = sphi 0, %s51
    %s66 = sphi 0, %s52
    %s70 = sphi 0, %s70
    %s72 = sphi 0, %s70
    %s73 = sphi 0, %s72
    %s87 = sphi 0, %s73
    %s91 = sphi 0, %s91
    %s93 = sphi 0, %s91
    %s94 = sphi 0, %s93
    %s108 = sphi 0, %s94
    %s112 = sphi 0, %s112
    %s114 = sphi 0, %s112
    %s115 = sphi 0, %s114
    %s129 = sphi 0, %s115
    %s133 = sphi 0, %s133
    %s135 = sphi 0, %s133
    %s136 = sphi 0, %s135
    %s150 = sphi 0, %s136
    %s154 = sphi 0, %s154
    %s156 = sphi 0, %s154
    %s157 = sphi 0, %s156
    %s171 = sphi 0, %s157
    %s177 = sphi 0, %s179
    %s180 = sphi 0, %s177
    %s181 = sphi 0, %s180
    %s197 = sphi 0, %s181
  $region4: #{mlp_reward_predictor_forward.1} parent=0 // loop_header_branch
    %18 = sbr.rel (%p16) target = $region8
  $region5: #{mlp_reward_predictor_forward.1} parent=0 // loop_body
    %s20 = ssub.s32 %s15, 1
    %s21 = ssub.s32 %s15, 2
    %s22 = sadd.s32 %s15, 1
    %s23 = ssub.s32 %s15, %s22
    %p24 = scmp.eq.s32.totalorder %s23, 0
    %s26 = sadd.s32 %s25, 1
    %s27 = scalar_select %p24, %s25, %s26
    %p30 = pneg %p24
    %p31 = scmp.eq.s32.totalorder %s15, 1
    %p32 = por %p30, %p31
    %p33 = scmp.ne.s32.totalorder %s25, %s28
    %p34 = scmp.eq.s32.totalorder %s15, 0
    %p35 = por %p33, %p34
    %p36 = scmp.ne.s32.totalorder %s25, %s28
    %p37 = scmp.eq.s32.totalorder %s20, 1
    %p38 = por %p36, %p37
    %p39 = scmp.ne.s32.totalorder %s28, %s29
    %p40 = scmp.eq.s32.totalorder %s20, 0
    %p41 = por %p39, %p40
    %p42 = scmp.ne.s32.totalorder %s28, %s29
    %p43 = scmp.eq.s32.totalorder %s21, 1
    %p44 = por %p42, %p43
    %p46 = scmp.ne.s32.totalorder %s29, %s45
    %p47 = scmp.eq.s32.totalorder %s21, 0
    %p48 = por %p46, %p47
    %s50 = sadd.s32 %s49, 1
    %p53 = scmp.eq.s32.totalorder %s15, 1
    %p54 = scmp.ne.s32.totalorder %s49, %s51
    %p55 = scmp.eq.s32.totalorder %s15, 0
    %p56 = por %p54, %p55
    %p57 = scmp.ne.s32.totalorder %s49, %s51
    %p58 = scmp.eq.s32.totalorder %s20, 1
    %p59 = por %p57, %p58
    %p60 = scmp.ne.s32.totalorder %s51, %s52
    %p61 = scmp.eq.s32.totalorder %s20, 0
    %p62 = por %p60, %p61
    %p63 = scmp.ne.s32.totalorder %s51, %s52
    %p64 = scmp.eq.s32.totalorder %s21, 1
    %p65 = por %p63, %p64
    %p67 = scmp.ne.s32.totalorder %s52, %s66
    %p68 = scmp.eq.s32.totalorder %s21, 0
    %p69 = por %p67, %p68
    %s71 = sadd.s32 %s70, 1
    %p74 = scmp.eq.s32.totalorder %s15, 1
    %p75 = scmp.ne.s32.totalorder %s70, %s72
    %p76 = scmp.eq.s32.totalorder %s15, 0
    %p77 = por %p75, %p76
    %p78 = scmp.ne.s32.totalorder %s70, %s72
    %p79 = scmp.eq.s32.totalorder %s20, 1
    %p80 = por %p78, %p79
    %p81 = scmp.ne.s32.totalorder %s72, %s73
    %p82 = scmp.eq.s32.totalorder %s20, 0
    %p83 = por %p81, %p82
    %p84 = scmp.ne.s32.totalorder %s72, %s73
    %p85 = scmp.eq.s32.totalorder %s21, 1
    %p86 = por %p84, %p85
    %p88 = scmp.ne.s32.totalorder %s73, %s87
    %p89 = scmp.eq.s32.totalorder %s21, 0
    %p90 = por %p88, %p89
    %s92 = sadd.s32 %s91, 1
    %p95 = scmp.eq.s32.totalorder %s15, 1
    %p96 = scmp.ne.s32.totalorder %s91, %s93
    %p97 = scmp.eq.s32.totalorder %s15, 0
    %p98 = por %p96, %p97
    %p99 = scmp.ne.s32.totalorder %s91, %s93
    %p100 = scmp.eq.s32.totalorder %s20, 1
    %p101 = por %p99, %p100
    %p102 = scmp.ne.s32.totalorder %s93, %s94
    %p103 = scmp.eq.s32.totalorder %s20, 0
    %p104 = por %p102, %p103
    %p105 = scmp.ne.s32.totalorder %s93, %s94
    %p106 = scmp.eq.s32.totalorder %s21, 1
    %p107 = por %p105, %p106
    %p109 = scmp.ne.s32.totalorder %s94, %s108
    %p110 = scmp.eq.s32.totalorder %s21, 0
    %p111 = por %p109, %p110
    %s113 = sadd.s32 %s112, 1
    %p116 = scmp.eq.s32.totalorder %s15, 1
    %p117 = scmp.ne.s32.totalorder %s112, %s114
    %p118 = scmp.eq.s32.totalorder %s15, 0
    %p119 = por %p117, %p118
    %p120 = scmp.ne.s32.totalorder %s112, %s114
    %p121 = scmp.eq.s32.totalorder %s20, 1
    %p122 = por %p120, %p121
    %p123 = scmp.ne.s32.totalorder %s114, %s115
    %p124 = scmp.eq.s32.totalorder %s20, 0
    %p125 = por %p123, %p124
    %p126 = scmp.ne.s32.totalorder %s114, %s115
    %p127 = scmp.eq.s32.totalorder %s21, 1
    %p128 = por %p126, %p127
    %p130 = scmp.ne.s32.totalorder %s115, %s129
    %p131 = scmp.eq.s32.totalorder %s21, 0
    %p132 = por %p130, %p131
    %s134 = sadd.s32 %s133, 1
    %p137 = scmp.eq.s32.totalorder %s15, 1
    %p138 = scmp.ne.s32.totalorder %s133, %s135
    %p139 = scmp.eq.s32.totalorder %s15, 0
    %p140 = por %p138, %p139
    %p141 = scmp.ne.s32.totalorder %s133, %s135
    %p142 = scmp.eq.s32.totalorder %s20, 1
    %p143 = por %p141, %p142
    %p144 = scmp.ne.s32.totalorder %s135, %s136
    %p145 = scmp.eq.s32.totalorder %s20, 0
    %p146 = por %p144, %p145
    %p147 = scmp.ne.s32.totalorder %s135, %s136
    %p148 = scmp.eq.s32.totalorder %s21, 1
    %p149 = por %p147, %p148
    %p151 = scmp.ne.s32.totalorder %s136, %s150
    %p152 = scmp.eq.s32.totalorder %s21, 0
    %p153 = por %p151, %p152
    %s155 = sadd.s32 %s154, 1
    %p158 = scmp.eq.s32.totalorder %s15, 1
    %p159 = scmp.ne.s32.totalorder %s154, %s156
    %p160 = scmp.eq.s32.totalorder %s15, 0
    %p161 = por %p159, %p160
    %p162 = scmp.ne.s32.totalorder %s154, %s156
    %p163 = scmp.eq.s32.totalorder %s20, 1
    %p164 = por %p162, %p163
    %p165 = scmp.ne.s32.totalorder %s156, %s157
    %p166 = scmp.eq.s32.totalorder %s20, 0
    %p167 = por %p165, %p166
    %p168 = scmp.ne.s32.totalorder %s156, %s157
    %p169 = scmp.eq.s32.totalorder %s21, 1
    %p170 = por %p168, %p169
    %p172 = scmp.ne.s32.totalorder %s157, %s171
    %p173 = scmp.eq.s32.totalorder %s21, 0
    %p174 = por %p172, %p173
    %s175 = ssub.s32 %s15, %s22
    %p176 = scmp.eq.s32.totalorder %s175, 0
    %s178 = sadd.s32 %s177, 1
    %s179 = scalar_select %p176, %s177, %s178
    %p182 = pneg %p176
    %p183 = scmp.eq.s32.totalorder %s15, 1
    %p184 = por %p182, %p183
    %p185 = scmp.ne.s32.totalorder %s177, %s180
    %p186 = scmp.eq.s32.totalorder %s15, 0
    %p187 = por %p185, %p186
    %p188 = scmp.ne.s32.totalorder %s177, %s180
    %p189 = scmp.eq.s32.totalorder %s20, 1
    %p190 = por %p188, %p189
    %p191 = scmp.ne.s32.totalorder %s180, %s181
    %p192 = scmp.eq.s32.totalorder %s20, 0
    %p193 = por %p191, %p192
    %p194 = scmp.ne.s32.totalorder %s180, %s181
    %p195 = scmp.eq.s32.totalorder %s21, 1
    %p196 = por %p194, %p195
    %p198 = scmp.ne.s32.totalorder %s181, %s197
    %p199 = scmp.eq.s32.totalorder %s21, 0
    %p200 = por %p198, %p199
    %p201 = scmp.le.s32.totalorder 1, %s15
    %p202 = scmp.lt.s32.totalorder %s15, 3
    %p203 = pnand %p201, %p202
    %p204 = pneg %p203
    // Predicated region
    $region9: #{mlp_reward_predictor_forward.1} parent=5 // pred_check
      _
    $region10: #{mlp_reward_predictor_forward.1} parent=5 // pred_check_branch
      %206 = sbr.rel (%p203) target = $region12
    $region11: #{mlp_reward_predictor_forward.1} parent=5 // pred_region
      %s207 = ssub.s32 %s15, 1
      // Predicated region
      $region13: #{mlp_reward_predictor_forward.1} parent=11 // pred_check
        %p208 = pneg %p62
      $region14: #{mlp_reward_predictor_forward.1} parent=11 // pred_check_branch
        %210 = sbr.rel (%p208) target = $region16
      $region15: #{mlp_reward_predictor_forward.1} parent=11 // pred_region
        _
      $region16: #{mlp_reward_predictor_forward.1} parent=11 // pred_fallthru
        _
      // Predicated region
      $region17: #{mlp_reward_predictor_forward.1} parent=11 // pred_check
        %p211 = pneg %p83
      $region18: #{mlp_reward_predictor_forward.1} parent=11 // pred_check_branch
        %213 = sbr.rel (%p211) target = $region20
      $region19: #{mlp_reward_predictor_forward.1} parent=11 // pred_region
        _
      $region20: #{mlp_reward_predictor_forward.1} parent=11 // pred_fallthru
        _
      // Predicated region
      $region21: #{mlp_reward_predictor_forward.1} parent=11 // pred_check
        %p214 = pneg %p104
      $region22: #{mlp_reward_predictor_forward.1} parent=11 // pred_check_branch
        %216 = sbr.rel (%p214) target = $region24
      $region23: #{mlp_reward_predictor_forward.1} parent=11 // pred_region
        _
      $region24: #{mlp_reward_predictor_forward.1} parent=11 // pred_fallthru
        _
      // Predicated region
      $region25: #{mlp_reward_predictor_forward.1} parent=11 // pred_check
        %p217 = pneg %p125
      $region26: #{mlp_reward_predictor_forward.1} parent=11 // pred_check_branch
        %219 = sbr.rel (%p217) target = $region28
      $region27: #{mlp_reward_predictor_forward.1} parent=11 // pred_region
        _
      $region28: #{mlp_reward_predictor_forward.1} parent=11 // pred_fallthru
        _
      // Predicated region
      $region29: #{mlp_reward_predictor_forward.1} parent=11 // pred_check
        %p220 = pneg %p146
      $region30: #{mlp_reward_predictor_forward.1} parent=11 // pred_check_branch
        %222 = sbr.rel (%p220) target = $region32
      $region31: #{mlp_reward_predictor_forward.1} parent=11 // pred_region
        _
      $region32: #{mlp_reward_predictor_forward.1} parent=11 // pred_fallthru
        _
      // Predicated region
      $region33: #{mlp_reward_predictor_forward.1} parent=11 // pred_check
        %p223 = pneg %p167
      $region34: #{mlp_reward_predictor_forward.1} parent=11 // pred_check_branch
        %225 = sbr.rel (%p223) target = $region36
      $region35: #{mlp_reward_predictor_forward.1} parent=11 // pred_region
        _
      $region36: #{mlp_reward_predictor_forward.1} parent=11 // pred_fallthru
        _
    $region12: #{mlp_reward_predictor_forward.1} parent=5 // pred_fallthru
      _
    %p226 = scmp.lt.s32.totalorder %s15, 2
    // Predicated region
    $region37: #{mlp_reward_predictor_forward.1} parent=5 // pred_check
      %p227 = pneg %p226
    $region38: #{mlp_reward_predictor_forward.1} parent=5 // pred_check_branch
      %229 = sbr.rel (%p227) target = $region40
    $region39: #{mlp_reward_predictor_forward.1} parent=5 // pred_region
      // Predicated region
      $region41: #{mlp_reward_predictor_forward.1} parent=39 // pred_check
        %p230 = pneg %p35
      $region42: #{mlp_reward_predictor_forward.1} parent=39 // pred_check_branch
        %232 = sbr.rel (%p230) target = $region44
      $region43: #{mlp_reward_predictor_forward.1} parent=39 // pred_region
        %s233 = smul.u32 4, %s15
        %p234 = scmp.lt.s32.totalorder %s233, 7
        %s235 = scalar_select %p234, %s233, 7
        %s236 = smul.addr %s235, 8
        %s237 = scalar_lea.vmem %s0, %s236
        %s238 = smul.u32 4, %s15
      $region44: #{mlp_reward_predictor_forward.1} parent=39 // pred_fallthru
        _
    $region40: #{mlp_reward_predictor_forward.1} parent=5 // pred_fallthru
      _
    %p239 = scmp.le.s32.totalorder 1, %s15
    %p240 = scmp.lt.s32.totalorder %s15, 3
    %p241 = pnand %p239, %p240
    %p242 = pneg %p241
    // Predicated region
    $region45: #{mlp_reward_predictor_forward.1} parent=5 // pred_check
      _
    $region46: #{mlp_reward_predictor_forward.1} parent=5 // pred_check_branch
      %244 = sbr.rel (%p241) target = $region48
    $region47: #{mlp_reward_predictor_forward.1} parent=5 // pred_region
      %s245 = ssub.s32 %s15, 1
      %s246 = smul.u32 4, %s20
      %p247 = scmp.lt.s32.totalorder %s246, 7
      %s248 = scalar_select %p247, %s246, 7
      %s249 = smul.addr %s248, 8
      %s250 = scalar_lea.vmem %s0, %s249
      %p251 = pneg %p41
      %p252 = pneg %p38
      %p253 = pneg %p62
      %p254 = pneg %p59
      %p255 = pneg %p83
      %p256 = pneg %p80
      %p257 = pneg %p104
      %p258 = pneg %p101
      %p259 = pneg %p125
      %p260 = pneg %p122
      %p261 = pneg %p146
      %p262 = pneg %p143
      %p263 = pneg %p167
      %p264 = pneg %p164
      %p265 = pneg %p193
      %p266 = pneg %p190
      %s267 = smul.u32 4, %s20
      %p268 = scmp.lt.s32.totalorder %s267, 7
      %s269 = scalar_select %p268, %s267, 7
      %s270 = smul.addr %s269, 8
      %s271 = scalar_lea.vmem %s7, %s270
      %s272 = smul.u32 4, %s20
      %p273 = scmp.lt.s32.totalorder %s272, 7
      %s274 = scalar_select %p273, %s272, 7
      %s275 = smul.addr %s274, 8
      %s276 = scalar_lea.vmem %s0, %s275
      %s277 = smul.u32 4, %s20
      %s278 = smul.u32 4, %s20
      %p279 = scmp.lt.s32.totalorder %s278, 7
      %s280 = scalar_select %p279, %s278, 7
      %s281 = smul.addr %s280, 8
      %s282 = scalar_lea.vmem %s7, %s281
      %s283 = smul.u32 4, %s20
      %v285 = vld [vmem:[%s276] sm:$0xff]
      %v286 = vld [vmem:[%s276 + $0x8] sm:$0xff]
      %v287 = vld [vmem:[%s276 + $0x10] sm:$0xff]
      %v288 = vld [vmem:[%s276 + $0x18] sm:$0xff]
      %v289 = vld [vmem:[%s1] sm:$0xff]
      %v290 = vld [vmem:[%s1 + $0x8] sm:$0x1f]
      %v291 = vld [vmem:[%s2] sm:$0x1]
      %v293 = vlaneseq
      %v294 = vshrl.u32 %v293, 7
      %v295 = vsub.s32 0, %v294
      %v296 = vrot.slane %v291, %v295
      %vm298 = vcmask 105472
      %v300 = vsel %vm298, %v285, 0
      %v303 = vsel %vm298, %v286, 0
      %v306 = vsel %vm298, %v287, 0
      %v309 = vsel %vm298, %v288, 0
      %vm311 = vcmask 1044480
      %v313 = vsel %vm311, %v290, 0
      %315 = vmatprep.subr.mxu0 0.0
      %316 = vmatpush1.msra.mxu0 %v289
      %317 = vmatprep.subr.mxu0 0.0
      %318 = vmatpush1.msra.mxu0 %v313
      %319 = vmatprep.subr.mxu0 0.0
      %320 = vmatpush1.msra.mxu0 0.0
      %321 = vmatprep.subr.mxu0 0.0
      %322 = vmatpush1.msra.mxu0 0.0
      %323 = vmatprep.subr.mxu0 0.0
      %324 = vmatpush1.msra.mxu0 0.0
      %325 = vmatprep.subr.mxu0 0.0
      %326 = vmatpush1.msra.mxu0 0.0
      %327 = vmatprep.subr.mxu0 0.0
      %328 = vmatpush1.msra.mxu0 0.0
      %329 = vmatprep.subr.mxu0 0.0
      %330 = vmatpush1.msra.mxu0 0.0
      %331 = vmatprep.subr.mxu0 0.0
      %332 = vmatpush1.msra.mxu0 0.0
      %333 = vmatprep.subr.mxu0 0.0
      %334 = vmatpush1.msra.mxu0 0.0
      %335 = vmatprep.subr.mxu0 0.0
      %336 = vmatpush1.msra.mxu0 0.0
      %337 = vmatprep.subr.mxu0 0.0
      %338 = vmatpush1.msra.mxu0 0.0
      %339 = vmatprep.subr.mxu0 0.0
      %340 = vmatpush1.msra.mxu0 0.0
      %341 = vmatprep.subr.mxu0 0.0
      %342 = vmatpush1.msra.mxu0 0.0
      %343 = vmatprep.subr.mxu0 0.0
      %344 = vmatpush1.msra.mxu0 0.0
      %345 = vmatprep.subr.mxu0 0.0
      %346 = vmatpush1.msra.mxu0 0.0
      %347 = vmatprep.subr.mxu0 0.0
      %348 = vmatpush1.msra.mxu0 0.0
      %349 = vmatprep.subr.mxu0 0.0
      %350 = vmatpush1.msra.mxu0 0.0
      %351 = vmatprep.subr.mxu0 0.0
      %352 = vmatpush1.msra.mxu0 0.0
      %353 = vmatprep.subr.mxu0 0.0
      %354 = vmatpush1.msra.mxu0 0.0
      %355 = vmatprep.subr.mxu0 0.0
      %356 = vmatpush1.msra.mxu0 0.0
      %357 = vmatprep.subr.mxu0 0.0
      %358 = vmatpush1.msra.mxu0 0.0
      %359 = vmatprep.subr.mxu0 0.0
      %360 = vmatpush1.msra.mxu0 0.0
      %361 = vmatprep.subr.mxu0 0.0
      %362 = vmatpush1.msra.mxu0 0.0
      %363 = vmatprep.subr.mxu0 0.0
      %364 = vmatpush1.msra.mxu0 0.0
      %365 = vmatprep.subr.mxu0 0.0
      %366 = vmatpush1.msra.mxu0 0.0
      %367 = vmatprep.subr.mxu0 0.0
      %368 = vmatpush1.msra.mxu0 0.0
      %369 = vmatprep.subr.mxu0 0.0
      %370 = vmatpush1.msra.mxu0 0.0
      %371 = vmatprep.subr.mxu0 0.0
      %372 = vmatpush1.msra.mxu0 0.0
      %373 = vmatprep.subr.mxu0 0.0
      %374 = vmatpush1.msra.mxu0 0.0
      %375 = vmatprep.subr.mxu0 0.0
      %376 = vmatpush1.msra.mxu0 0.0
      %377 = vmatprep.subr.mxu0 0.0
      %378 = vmatpush1.msra.mxu0 0.0
      %379 = vmatprep.mubr.f32.mxu0 0.0
      %380 = vmatmul.mubr.f32.gmra.mrb[0].mxu0 %v300
      %v381 = vpop.f32.mrb[0].mxu0
      %v382 = vadd.f32 %v296, %v381
      %v383 = vpop.f32.mrb[0].mxu0
      %384 = vmatprep.mubr.f32.mxu0 0.0
      %385 = vmatmul.mubr.f32.gmra.mrb[0].mxu0 %v303
      %v386 = vpop.f32.mrb[0].mxu0
      %v387 = vadd.f32 %v296, %v386
      %v388 = vpop.f32.mrb[0].mxu0
      %389 = vmatprep.mubr.f32.mxu0 0.0
      %390 = vmatmul.mubr.f32.gmra.mrb[0].mxu0 %v306
      %v391 = vpop.f32.mrb[0].mxu0
      %v392 = vadd.f32 %v296, %v391
      %v393 = vpop.f32.mrb[0].mxu0
      %394 = vmatprep.mubr.f32.mxu0 0.0
      %395 = vmatmul.mubr.f32.gmra.mrb[0].mxu0 %v309
      %v396 = vpop.f32.mrb[0].mxu0
      %v397 = vadd.f32 %v296, %v396
      %v398 = vpop.f32.mrb[0].mxu0
      %399 = vdwg.mxu0
      %v400 = vmax.f32 %v382, 0.0
      %v401 = vmax.f32 %v387, 0.0
      %v402 = vmax.f32 %v392, 0.0
      %v403 = vmax.f32 %v397, 0.0
      %v404 = vpack.c.bf16 %v401, %v400
      %v405 = vpack.c.bf16 %v403, %v402
      %v406 = vld [vmem:[%s3] sm:$0xf]
      %v407 = vld [vmem:[%s3 + $0x4] sm:$0xf]
      %v408 = vld [vmem:[%s3 + $0x8] sm:$0xf]
      %v409 = vld [vmem:[%s3 + $0xc] sm:$0xf]
      %v410 = vld [vmem:[%s3 + $0x10] sm:$0xf]
      %v411 = vld [vmem:[%s3 + $0x14] sm:$0xf]
      %v412 = vld [vmem:[%s3 + $0x18] sm:$0xf]
      %v413 = vld [vmem:[%s3 + $0x1c] sm:$0xf]
      %v414 = vld [vmem:[%s3 + $0x20] sm:$0xf]
      %v415 = vld [vmem:[%s3 + $0x24] sm:$0xf]
      %v416 = vld [vmem:[%s3 + $0x28] sm:$0xf]
      %v417 = vld [vmem:[%s3 + $0x2c] sm:$0xf]
      %v418 = vld [vmem:[%s3 + $0x30] sm:$0xf]
      %v419 = vld [vmem:[%s3 + $0x34] sm:$0xf]
      %v420 = vld [vmem:[%s3 + $0x38] sm:$0xf]
      %v421 = vld [vmem:[%s3 + $0x3c] sm:$0xf]
      %v422 = vld [vmem:[%s4] sm:$0x1]
      %v424 = vlaneseq
      %v425 = vshrl.u32 %v424, 7
      %v426 = vsub.s32 0, %v425
      %v427 = vrot.slane %v422, %v426
      %v445 = vunpack.c.l.b16 %v406
      %v446 = vunpack.c.l.b16 %v407
      %v447 = vunpack.c.l.b16 %v408
      %v448 = vunpack.c.l.b16 %v409
      %v449 = vunpack.c.l.b16 %v410
      %v450 = vunpack.c.l.b16 %v411
      %v451 = vunpack.c.l.b16 %v412
      %v452 = vunpack.c.l.b16 %v413
      %v453 = vunpack.c.l.b16 %v414
      %v454 = vunpack.c.l.b16 %v415
      %v455 = vunpack.c.l.b16 %v416
      %v456 = vunpack.c.l.b16 %v417
      %v457 = vunpack.c.l.b16 %v418
      %v458 = vunpack.c.l.b16 %v419
      %v459 = vunpack.c.l.b16 %v420
      %v460 = vunpack.c.l.b16 %v421
      %v461 = vpack.c.b16 %v446, %v445
      %v462 = vpack.c.b16 %v448, %v447
      %v463 = vpack.c.b16 %v450, %v449
      %v464 = vpack.c.b16 %v452, %v451
      %v465 = vpack.c.b16 %v454, %v453
      %v466 = vpack.c.b16 %v456, %v455
      %v467 = vpack.c.b16 %v458, %v457
      %v468 = vpack.c.b16 %v460, %v459
      %477 = vmatprep.subr.bf16.mxu0 0
      %478 = vmatpush1.bf16.msra.mxu0 %v461
      %479 = vmatprep.subr.bf16.mxu0 0
      %480 = vmatpush1.bf16.msra.mxu0 %v462
      %481 = vmatprep.subr.bf16.mxu0 0
      %482 = vmatpush1.bf16.msra.mxu0 %v463
      %483 = vmatprep.subr.bf16.mxu0 0
      %484 = vmatpush1.bf16.msra.mxu0 %v464
      %485 = vmatprep.subr.bf16.mxu0 0
      %486 = vmatpush1.bf16.msra.mxu0 %v465
      %487 = vmatprep.subr.bf16.mxu0 0
      %488 = vmatpush1.bf16.msra.mxu0 %v466
      %489 = vmatprep.subr.bf16.mxu0 0
      %490 = vmatpush1.bf16.msra.mxu0 %v467
      %491 = vmatprep.subr.bf16.mxu0 0
      %492 = vmatpush1.bf16.msra.mxu0 %v468
      %493 = vmatprep.subr.bf16.mxu0 0
      %494 = vmatpush1.bf16.msra.mxu0 0
      %495 = vmatprep.subr.bf16.mxu0 0
      %496 = vmatpush1.bf16.msra.mxu0 0
      %497 = vmatprep.subr.bf16.mxu0 0
      %498 = vmatpush1.bf16.msra.mxu0 0
      %499 = vmatprep.subr.bf16.mxu0 0
      %500 = vmatpush1.bf16.msra.mxu0 0
      %501 = vmatprep.subr.bf16.mxu0 0
      %502 = vmatpush1.bf16.msra.mxu0 0
      %503 = vmatprep.subr.bf16.mxu0 0
      %504 = vmatpush1.bf16.msra.mxu0 0
      %505 = vmatprep.subr.bf16.mxu0 0
      %506 = vmatpush1.bf16.msra.mxu0 0
      %507 = vmatprep.subr.bf16.mxu0 0
      %508 = vmatpush1.bf16.msra.mxu0 0
      %509 = vmatprep.mubr.bf16.mxu0 0
      %510 = vmatmul.mubr.bf16.gmra.mrb[0].mxu0 %v404
      %v511 = vpop.f32.mrb[0].mxu0
      %v512 = vadd.f32 %v427, %v511
      %v513 = vpop.f32.mrb[0].mxu0
      %v514 = vpop.f32.mrb[0].mxu0
      %v515 = vadd.f32 %v427, %v514
      %v516 = vpop.f32.mrb[0].mxu0
      %517 = vmatprep.mubr.bf16.mxu0 0
      %518 = vmatmul.mubr.bf16.gmra.mrb[0].mxu0 %v405
      %v519 = vpop.f32.mrb[0].mxu0
      %v520 = vadd.f32 %v427, %v519
      %v521 = vpop.f32.mrb[0].mxu0
      %v522 = vpop.f32.mrb[0].mxu0
      %v523 = vadd.f32 %v427, %v522
      %v524 = vpop.f32.mrb[0].mxu0
      %525 = vdwg.mxu0
      %v526 = vmax.f32 %v512, 0.0
      %v527 = vmax.f32 %v515, 0.0
      %v528 = vmax.f32 %v520, 0.0
      %v529 = vmax.f32 %v523, 0.0
      %v530 = vld [vmem:[%s5] sm:$0x1]
      %v532 = vlaneseq
      %v533 = vshrl.u32 %v532, 7
      %v534 = vsub.s32 0, %v533
      %v535 = vrot.slane %v530, %v534
      %v537 = vmul.f32 %v526, %v535
      %v538 = vmul.f32 %v527, %v535
      %v539 = vmul.f32 %v528, %v535
      %v540 = vmul.f32 %v529, %v535
      %541 = vadd.xlane.f32.xlu0 %v537
      %v542 = vpop.xlane.xlu0 %541
      %543 = vadd.xlane.f32.xlu0 %v538
      %v544 = vpop.xlane.xlu0 %543
      %545 = vadd.xlane.f32.xlu0 %v539
      %v546 = vpop.xlane.xlu0 %545
      %547 = vadd.xlane.f32.xlu0 %v540
      %v548 = vpop.xlane.xlu0 %547
      %v549 = vld [vmem:[#allocation2] sm:$0x1]
      %v551 = vlaneseq
      %v552 = vshrl.u32 %v551, 7
      %v553 = vsub.s32 0, %v552
      %v554 = vrot.slane %v549, %v553
      %v556 = vadd.f32 %v542, %v554
      %v557 = vadd.f32 %v544, %v554
      %v558 = vadd.f32 %v546, %v554
      %v559 = vadd.f32 %v548, %v554
      %vm560 = vcmask 7168
      %561 = vst.msk [vmem:[%s282] sm:$0xff] %vm560, %v556
      %562 = vst.msk [vmem:[%s282 + $0x8] sm:$0xff] %vm560, %v557
      %563 = vst.msk [vmem:[%s282 + $0x10] sm:$0xff] %vm560, %v558
      %564 = vst.msk [vmem:[%s282 + $0x18] sm:$0xff] %vm560, %v559
      %s565 = smul.u32 4, %s20
      %p566 = scmp.lt.s32.totalorder %s565, 7
      %s567 = scalar_select %p566, %s565, 7
      %s568 = smul.addr %s567, 8
      %s569 = scalar_lea.vmem %s7, %s568
      // Predicated region
      $region49: #{mlp_reward_predictor_forward.1} parent=47 // pred_check
        %p570 = pneg %p190
      $region50: #{mlp_reward_predictor_forward.1} parent=47 // pred_check_branch
        %572 = sbr.rel (%p570) target = $region52
      $region51: #{mlp_reward_predictor_forward.1} parent=47 // pred_region
        %s573 = smul.u32 4, %s20
      $region52: #{mlp_reward_predictor_forward.1} parent=47 // pred_fallthru
        _
    $region48: #{mlp_reward_predictor_forward.1} parent=5 // pred_fallthru
      _
    %p574 = scmp.le.s32.totalorder 2, %s15
    // Predicated region
    $region53: #{mlp_reward_predictor_forward.1} parent=5 // pred_check
      %p575 = pneg %p574
    $region54: #{mlp_reward_predictor_forward.1} parent=5 // pred_check_branch
      %577 = sbr.rel (%p575) target = $region56
    $region55: #{mlp_reward_predictor_forward.1} parent=5 // pred_region
      %s578 = ssub.s32 %s15, 2
      // Predicated region
      $region57: #{mlp_reward_predictor_forward.1} parent=55 // pred_check
        %p579 = pneg %p196
      $region58: #{mlp_reward_predictor_forward.1} parent=55 // pred_check_branch
        %581 = sbr.rel (%p579) target = $region60
      $region59: #{mlp_reward_predictor_forward.1} parent=55 // pred_region
        %s582 = smul.u32 4, %s21
        %p583 = scmp.lt.s32.totalorder %s582, 7
        %s584 = scalar_select %p583, %s582, 7
        %s585 = smul.addr %s584, 8
        %s586 = scalar_lea.vmem %s7, %s585
      $region60: #{mlp_reward_predictor_forward.1} parent=55 // pred_fallthru
        _
    $region56: #{mlp_reward_predictor_forward.1} parent=5 // pred_fallthru
      _
  $region6: #{mlp_reward_predictor_forward.1} parent=0 // loop_footer
    %s19 = sadd.s32 1, %s15
  $region7: #{mlp_reward_predictor_forward.1} parent=0 // loop_footer_branch
    %14 = sbr.rel target = $region3
  $region8: #{mlp_reward_predictor_forward.1} parent=0 // loop_exit
    _

</llo_original>
